<compile_context>
chip_gen: v7x
topology: tpu7x:2x2x1
jax: 0.10.0
libtpu: 0.0.40
codegen_flags: <defaults>
</compile_context>

<pallas_src>
import jax
import jax.numpy as jnp
from jax import lax
from jax.experimental import pallas as pl
from jax.experimental.pallas import tpu as pltpu

# ----------------------------- configuration (small synthetic shapes) ------
T = 8                      # number of video frames
H = W = 32                 # input frame spatial size
C = 3                      # RGB
STD_H = STD_W = 32         # STD_SIZE (scaled down from (256, 256))
CROP_H = CROP_W = 16       # crop_height / crop_width (scaled down from 96)
HALF_H = CROP_H // 2
HALF_W = CROP_W // 2
WINDOW_MARGIN = 4          # window_margin (scaled down from 12)
START_IDX, STOP_IDX = 48, 68
STABLE_IDS = (33, 36, 39, 42, 45)

N_OUT = CROP_H * CROP_W    # 256 crop pixels -> lane-dense output
TB = 4                     # frames per grid step (grid=(2,) -> 1 step/core on v7x)
assert T % TB == 0
assert CROP_W & (CROP_W - 1) == 0, "CROP_W must be a power of two"
CROP_W_SHIFT = CROP_W.bit_length() - 1


# ----------------------------- Pallas kernel -------------------------------
def lip_crop_kernel(params_ref, frame_ref, out_ref):
    """Fused bilinear inverse warp + mouth crop for TB frames.

    params_ref: SMEM (T, 4) f32, per-frame [ia, ib, ox0, oy0] such that the
                source coordinate of crop pixel (r, c) is
                  xs = ia*c + ib*r + ox0 ;  ys = -ib*c + ia*r + oy0
                (inverse similarity with the crop origin folded in).
    frame_ref : VMEM (TB, C*H, W) f32, channel-major rows of the source frame.
    out_ref   : VMEM (TB, C, N_OUT) f32, 255-scaled floored crop patches.
    """
    # --- frame-independent coordinate setup (hoisted out of the TB loop) ---
    oidx = lax.broadcasted_iota(jnp.int32, (1, N_OUT), 1)
    r_f = (oidx >> CROP_W_SHIFT).astype(jnp.float32)        # crop-local row
    c_f = (oidx & (CROP_W - 1)).astype(jnp.float32)         # crop-local col
    # f32 source-pixel coordinates for the tent weights (one-time casts)
    xsrc_f = lax.broadcasted_iota(jnp.int32, (W, N_OUT), 0).astype(jnp.float32)
    ysrc_f = lax.broadcasted_iota(jnp.int32, (H, N_OUT), 0).astype(jnp.float32)

    t0 = pl.program_id(0) * TB

    def frame_body(tb, carry):
        t = t0 + tb
        # scalar reads from SMEM (scalar unit; no vector lane extraction)
        ia = params_ref[t, 0]
        ib = params_ref[t, 1]
        ox0 = params_ref[t, 2]
        oy0 = params_ref[t, 3]

        # inverse similarity: crop pixel -> source (col, row) coordinate
        xs = ia * c_f + ib * r_f + ox0                      # (1, N_OUT)
        ys = -ib * c_f + ia * r_f + oy0

        # Separable bilinear weights as tent functions: weight of source pixel
        # p for target coordinate s is max(0, 1-|p - s|).  Out-of-bounds taps
        # get weight 0 == skimage constant mode, cval=0.  No floor / int
        # compares / casts needed.
        cx = jnp.maximum(1.0 - jnp.abs(xsrc_f - xs), 0.0)   # (W, N_OUT)
        ry = jnp.maximum(1.0 - jnp.abs(ysrc_f - ys), 0.0)   # (H, N_OUT)

        # Column interpolation as one small MXU matmul ...
        # (for real shapes W=256/N_OUT=9216: cast operands to bf16 and tile
        #  N_OUT on a second grid axis — see header notes.)
        g = jnp.dot(frame_ref[tb], cx,
                    preferred_element_type=jnp.float32)     # (C*H, N_OUT)

        # ... rows resolved by a masked sublane reduction per channel, each
        # channel row stored directly (no concat / (C, N_OUT) temp).
        for ch in range(C):                                  # static, C=3
            gc = g[ch * H:(ch + 1) * H, :]                   # (H, N_OUT)
            row = jnp.sum(gc * ry, axis=0, keepdims=True)    # (1, N_OUT)
            # warped * 255, uint8 truncation on host; clamp guards fp wrap.
            out_ref[tb, pl.ds(ch, 1), :] = jnp.clip(
                jnp.floor(row * 255.0), 0.0, 255.0)
        return carry

    # fori_loop bounds each frame's live ranges (avoids spilling past the
    # 64-vreg file that a 4-way static unroll can cause).
    lax.fori_loop(0, TB, frame_body, 0)


def lip_detect_crop_pallas(params4, video_cm):
    """params4: (T, 4) f32 folded inverse-warp params; video_cm: (T, C*H, W) f32."""
    out = pl.pallas_call(
        lip_crop_kernel,
        out_shape=jax.ShapeDtypeStruct((T, C, N_OUT), jnp.float32),
        grid_spec=pltpu.PrefetchScalarGridSpec(
            num_scalar_prefetch=1,                 # params land in SMEM
            grid=(T // TB,),
            in_specs=[pl.BlockSpec((TB, C * H, W), lambda i, p: (i, 0, 0))],
            out_specs=pl.BlockSpec((TB, C, N_OUT), lambda i, p: (i, 0, 0)),
        ),
        compiler_params=pltpu.CompilerParams(
            dimension_semantics=("parallel",)),     # frames independent -> v7x 2-TC
    )(params4, video_cm)
    # (T, C, N_OUT) lane-dense kernel output -> (T, crop_h, crop_w, C) uint8
    out = out.reshape(T, C, CROP_H, CROP_W).transpose(0, 2, 3, 1)
    return out.astype(jnp.uint8)


# ----------------------------- JAX glue (tiny, per-frame) -------------------
def estimate_similarity(src, dst):
    """Least-squares 2D similarity mapping src -> dst (5 points).
    TODO(synk): skimage 'similarity' uses Umeyama with an SVD reflection
    branch; this closed form matches it for generic (non-degenerate) inputs."""
    mu_s = src.mean(0)
    mu_d = dst.mean(0)
    sc = src - mu_s
    dc = dst - mu_d
    denom = jnp.sum(sc * sc)
    a = jnp.sum(sc[:, 0] * dc[:, 0] + sc[:, 1] * dc[:, 1]) / denom
    b = jnp.sum(sc[:, 0] * dc[:, 1] - sc[:, 1] * dc[:, 0]) / denom
    tx = mu_d[0] - (a * mu_s[0] - b * mu_s[1])
    ty = mu_d[1] - (b * mu_s[0] + a * mu_s[1])
    return a, b, tx, ty


def build_kernel_params(landmarks, mean_face):
    """Window-smoothed similarity fit + mouth-centre crop origin, folded into
    the 4 per-frame scalars [ia, ib, ox0, oy0] the kernel needs."""
    margin = min(T, WINDOW_MARGIN)
    n_tf = T - margin + 1
    win = jnp.arange(n_tf)[:, None] + jnp.arange(margin)[None, :]
    smoothed = jnp.mean(landmarks[win], axis=1)                 # (n_tf, 68, 2)
    src = smoothed[:, jnp.array(STABLE_IDS), :]                 # (n_tf, 5, 2)
    dst = mean_face[jnp.array(STABLE_IDS), :]                   # (5, 2)
    a, b, tx, ty = jax.vmap(lambda s: estimate_similarity(s, dst))(src)
    # trailing frames reuse the last computed transform (as in crop_patch)
    eff = jnp.minimum(jnp.arange(T), T - margin)
    a, b, tx, ty = a[eff], b[eff], tx[eff], ty[eff]

    # inverse similarity
    det = a * a + b * b
    ia, ib = a / det, b / det
    itx = -(a * tx + b * ty) / det
    ity = (b * tx - a * ty) / det

    # trans(cur_landmarks) on the raw per-frame mouth points -> crop centre.
    mouth = landmarks[:, START_IDX:STOP_IDX, :]                 # (T, 20, 2)
    mlx = a[:, None] * mouth[:, :, 0] - b[:, None] * mouth[:, :, 1] + tx[:, None]
    mly = b[:, None] * mouth[:, :, 0] + a[:, None] * mouth[:, :, 1] + ty[:, None]
    mx = jnp.clip(jnp.mean(mlx, axis=1), float(HALF_W), float(STD_W - HALF_W))
    my = jnp.clip(jnp.mean(mly, axis=1), float(HALF_H), float(STD_H - HALF_H))
    # TODO(synk): cut_patch's "too much bias" exceptions have no kernel
    # equivalent; only the boundary clamp is kept.
    rx0 = jnp.round(mx) - HALF_W          # np.round == jnp.round (half-to-even)
    ry0 = jnp.round(my) - HALF_H

    # fold the crop origin into the inverse-warp translation
    ox0 = ia * rx0 + ib * ry0 + itx
    oy0 = -ib * rx0 + ia * ry0 + ity
    return jnp.stack([ia, ib, ox0, oy0], axis=1).astype(jnp.float32)


def reference_crops(params4, video):
    """Pure-JAX reference: direct 4-tap bilinear gather (XLA) for validation."""
    ia, ib, ox0, oy0 = [params4[:, k][:, None, None] for k in range(4)]
    rr = jnp.arange(CROP_H, dtype=jnp.float32)[None, :, None]
    cc = jnp.arange(CROP_W, dtype=jnp.float32)[None, None, :]
    xs = ia * cc + ib * rr + ox0
    ys = -ib * cc + ia * rr + oy0
    x0 = jnp.floor(xs)
    y0 = jnp.floor(ys)
    fx = xs - x0
    fy = ys - y0
    x0i = x0.astype(jnp.int32)
    y0i = y0.astype(jnp.int32)
    frames = jnp.transpose(video, (0, 3, 1, 2))                 # (T, C, H, W)

    def tap(dy, dx):
        yi = y0i + dy
        xi = x0i + dx
        valid = (yi >= 0) & (yi < H) & (xi >= 0) & (xi < W)
        yc = jnp.clip(yi, 0, H - 1)
        xc = jnp.clip(xi, 0, W - 1)
        vals = jax.vmap(lambda f, yy, xx: f[:, yy, xx])(frames, yc, xc)
        wy = fy if dy else (1.0 - fy)
        wx = fx if dx else (1.0 - fx)
        wgt = jnp.where(valid, wy * wx, 0.0)
        return vals * wgt[:, None]

    patch = tap(0, 0) + tap(0, 1) + tap(1, 0) + tap(1, 1)       # (T, C, 16, 16)
    out = jnp.clip(jnp.floor(patch * 255.0), 0.0, 255.0).astype(jnp.uint8)
    return jnp.transpose(out, (0, 2, 3, 1))


# ----------------------------- main -----------------------------------------
if __name__ == "__main__":
    key = jax.random.PRNGKey(0)
    k_face, k_trans, k_noise, k_video = jax.random.split(key, 4)

    # deterministic stand-in for 20words_mean_face.npy (68 (x, y) points)
    mean_face = jax.random.uniform(k_face, (68, 2), minval=8.0, maxval=24.0)

    # TODO(synk): RetinaFace/FAN detectors + None-interpolation have no Pallas
    # equivalent; landmarks are synthesised as a per-frame similarity of the
    # mean face plus noise (every frame "detected", so interpolation is a no-op).
    thetas = 0.03 * jnp.arange(T, dtype=jnp.float32)
    scales = 1.0 + 0.02 * jnp.arange(T, dtype=jnp.float32)
    trans = jax.random.uniform(k_trans, (T, 2), minval=-2.0, maxval=2.0)
    noise = 0.2 * jax.random.normal(k_noise, (T, 68, 2))
    cos_t, sin_t = jnp.cos(thetas), jnp.sin(thetas)
    mfx, mfy = mean_face[:, 0], mean_face[:, 1]
    lx = scales[:, None] * (cos_t[:, None] * mfx[None] - sin_t[:, None] * mfy[None]) + trans[:, 0:1]
    ly = scales[:, None] * (sin_t[:, None] * mfx[None] + cos_t[:, None] * mfy[None]) + trans[:, 1:2]
    landmarks = jnp.stack([lx, ly], axis=-1) + noise            # (T, 68, 2)

    # synthetic video in [0, 1] (skimage converts uint8 frames to this range)
    video = jax.random.uniform(k_video, (T, H, W, C), dtype=jnp.float32)

    params4 = build_kernel_params(landmarks, mean_face)          # (T, 4)
    video_cm = jnp.transpose(video, (0, 3, 1, 2)).reshape(T, C * H, W)

    crops = lip_detect_crop_pallas(params4, video_cm)
    crops = jax.block_until_ready(crops)

    assert crops.shape == (T, CROP_H, CROP_W, C), crops.shape
    assert crops.dtype == jnp.uint8, crops.dtype

    # correctness vs a direct-gather pure-JAX reference (allow 1 LSB from the
    # uint8 truncation boundary under f32 reassociation / tent-vs-floor ulps)
    ref = jax.block_until_ready(reference_crops(params4, video))
    max_diff = int(jnp.max(jnp.abs(crops.astype(jnp.int32) - ref.astype(jnp.int32))))
    assert max_diff <= 1, max_diff

    print("KERNEL_OK")
</pallas_src>

<mosaic_0001>
module attributes {stable_mosaic.version = 11 : i64} {
  func.func @lip_crop_kernel(%arg0: i32, %arg1: memref<8x4xf32, #tpu.memory_space<smem>>, %arg2: memref<4x96x32xf32, #tpu.memory_space<vmem>>, %arg3: memref<4x3x256xf32, #tpu.memory_space<vmem>>) attributes {dimension_semantics = [#tpu.dimension_semantics<parallel>], iteration_bounds = array<i64: 2>, scalar_prefetch = 1 : i64, scratch_operands = 0 : i64, tpu.core_type = #tpu.core_type<tc>, window_params = [{transform_indices = @transform_0, window_bounds = array<i64: 4, 96, 32>}, {transform_indices = @transform_1, window_bounds = array<i64: 4, 3, 256>}]} {
    %0 = tpu.iota {dimensions = array<i32: 1>} : vector<1x256xi32>
    %c4_i32 = arith.constant 4 : i32
    %1 = vector.broadcast %c4_i32 : i32 to vector<1x256xi32>
    %2 = arith.shrsi %0, %1 : vector<1x256xi32>
    %3 = arith.sitofp %2 : vector<1x256xi32> to vector<1x256xf32>
    %c15_i32 = arith.constant 15 : i32
    %4 = vector.broadcast %c15_i32 : i32 to vector<1x256xi32>
    %5 = arith.andi %0, %4 : vector<1x256xi32>
    %6 = arith.sitofp %5 : vector<1x256xi32> to vector<1x256xf32>
    %7 = tpu.iota {dimensions = array<i32: 0>} : vector<32x256xi32>
    %8 = arith.sitofp %7 : vector<32x256xi32> to vector<32x256xf32>
    %9 = tpu.iota {dimensions = array<i32: 0>} : vector<32x256xi32>
    %10 = arith.sitofp %9 : vector<32x256xi32> to vector<32x256xf32>
    %c4_i32_0 = arith.constant 4 : i32
    %11 = arith.muli %arg0, %c4_i32_0 : i32
    %c0_i32 = arith.constant 0 : i32
    %c4_i32_1 = arith.constant 4 : i32
    %12 = arith.addi %c0_i32, %c4_i32_1 : i32
    %c1_i32 = arith.constant 1 : i32
    scf.for %arg4 = %c0_i32 to %12 step %c1_i32  : i32 {
      %13 = arith.addi %11, %arg4 : i32
      %14 = arith.index_cast %13 : i32 to index
      %c0 = arith.constant 0 : index
      %15 = memref.load %arg1[%14, %c0] : memref<8x4xf32, #tpu.memory_space<smem>>
      %16 = arith.index_cast %13 : i32 to index
      %c1 = arith.constant 1 : index
      %17 = memref.load %arg1[%16, %c1] : memref<8x4xf32, #tpu.memory_space<smem>>
      %18 = arith.index_cast %13 : i32 to index
      %c2 = arith.constant 2 : index
      %19 = memref.load %arg1[%18, %c2] : memref<8x4xf32, #tpu.memory_space<smem>>
      %20 = arith.index_cast %13 : i32 to index
      %c3 = arith.constant 3 : index
      %21 = memref.load %arg1[%20, %c3] : memref<8x4xf32, #tpu.memory_space<smem>>
      %22 = vector.broadcast %15 : f32 to vector<1x256xf32>
      %23 = arith.mulf %22, %6 : vector<1x256xf32>
      %24 = vector.broadcast %17 : f32 to vector<1x256xf32>
      %25 = arith.mulf %24, %3 : vector<1x256xf32>
      %26 = arith.addf %23, %25 : vector<1x256xf32>
      %27 = vector.broadcast %19 : f32 to vector<1x256xf32>
      %28 = arith.addf %26, %27 : vector<1x256xf32>
      %cst = arith.constant 0.000000e+00 : f32
      %29 = arith.subf %cst, %17 : f32
      %30 = vector.broadcast %29 : f32 to vector<1x256xf32>
      %31 = arith.mulf %30, %6 : vector<1x256xf32>
      %32 = vector.broadcast %15 : f32 to vector<1x256xf32>
      %33 = arith.mulf %32, %3 : vector<1x256xf32>
      %34 = arith.addf %31, %33 : vector<1x256xf32>
      %35 = vector.broadcast %21 : f32 to vector<1x256xf32>
      %36 = arith.addf %34, %35 : vector<1x256xf32>
      %37 = vector.broadcast %28 : vector<1x256xf32> to vector<32x256xf32>
      %38 = arith.subf %8, %37 : vector<32x256xf32>
      %39 = math.absf %38 : vector<32x256xf32>
      %cst_3 = arith.constant 1.000000e+00 : f32
      %40 = vector.broadcast %cst_3 : f32 to vector<32x256xf32>
      %41 = arith.subf %40, %39 : vector<32x256xf32>
      %cst_4 = arith.constant 0.000000e+00 : f32
      %42 = vector.broadcast %cst_4 : f32 to vector<32x256xf32>
      %43 = arith.maximumf %41, %42 : vector<32x256xf32>
      %44 = vector.broadcast %36 : vector<1x256xf32> to vector<32x256xf32>
      %45 = arith.subf %10, %44 : vector<32x256xf32>
      %46 = math.absf %45 : vector<32x256xf32>
      %cst_5 = arith.constant 1.000000e+00 : f32
      %47 = vector.broadcast %cst_5 : f32 to vector<32x256xf32>
      %48 = arith.subf %47, %46 : vector<32x256xf32>
      %cst_6 = arith.constant 0.000000e+00 : f32
      %49 = vector.broadcast %cst_6 : f32 to vector<32x256xf32>
      %50 = arith.maximumf %48, %49 : vector<32x256xf32>
      %51 = arith.index_cast %arg4 : i32 to index
      %c0_7 = arith.constant 0 : index
      %c0_8 = arith.constant 0 : index
      %52 = vector.load %arg2[%51, %c0_7, %c0_8] : memref<4x96x32xf32, #tpu.memory_space<vmem>>, vector<1x96x32xf32>
      %53 = vector.shape_cast %52 : vector<1x96x32xf32> to vector<96x32xf32>
      %cst_9 = arith.constant dense<0.000000e+00> : vector<96x256xf32>
      %54 = tpu.matmul %53, %43, %cst_9 {dimension_numbers = #tpu.dot_dimension_numbers<[1], [0], [0], [1], [0, 0, 1, 1], [], []>} : vector<96x32xf32>, vector<32x256xf32>, vector<96x256xf32> -> vector<96x256xf32>
      %55 = vector.extract_strided_slice %54 {offsets = [0, 0], sizes = [32, 256], strides = [1, 1]} : vector<96x256xf32> to vector<32x256xf32>
      %56 = arith.mulf %55, %50 : vector<32x256xf32>
      %cst_10 = arith.constant dense<0.000000e+00> : vector<256xf32>
      %57 = vector.multi_reduction <add>, %56, %cst_10 [0] : vector<32x256xf32> to vector<256xf32>
      %58 = vector.shape_cast %57 : vector<256xf32> to vector<1x256xf32>
      %cst_11 = arith.constant 2.550000e+02 : f32
      %59 = vector.broadcast %cst_11 : f32 to vector<1x256xf32>
      %60 = arith.mulf %58, %59 : vector<1x256xf32>
      %61 = math.floor %60 : vector<1x256xf32>
      %cst_12 = arith.constant 0.000000e+00 : f32
      %cst_13 = arith.constant 2.550000e+02 : f32
      %62 = vector.broadcast %cst_12 : f32 to vector<1x256xf32>
      %63 = arith.maximumf %62, %61 : vector<1x256xf32>
      %64 = vector.broadcast %cst_13 : f32 to vector<1x256xf32>
      %65 = arith.minimumf %64, %63 : vector<1x256xf32>
      %66 = arith.index_cast %arg4 : i32 to index
      %c0_14 = arith.constant 0 : index
      %c0_15 = arith.constant 0 : index
      %67 = vector.load %arg3[%66, %c0_14, %c0_15] : memref<4x3x256xf32, #tpu.memory_space<vmem>>, vector<1x1x256xf32>
      %68 = vector.shape_cast %67 : vector<1x1x256xf32> to vector<1x256xf32>
      %69 = vector.shape_cast %65 : vector<1x256xf32> to vector<1x1x256xf32>
      tpu.vector_store %arg3[%66, %c0_14, %c0_15], %69 {strides = array<i32>} : memref<4x3x256xf32, #tpu.memory_space<vmem>>, vector<1x1x256xf32>,
      %70 = vector.extract_strided_slice %54 {offsets = [32, 0], sizes = [32, 256], strides = [1, 1]} : vector<96x256xf32> to vector<32x256xf32>
      %71 = arith.mulf %70, %50 : vector<32x256xf32>
      %cst_16 = arith.constant dense<0.000000e+00> : vector<256xf32>
      %72 = vector.multi_reduction <add>, %71, %cst_16 [0] : vector<32x256xf32> to vector<256xf32>
      %73 = vector.shape_cast %72 : vector<256xf32> to vector<1x256xf32>
      %cst_17 = arith.constant 2.550000e+02 : f32
      %74 = vector.broadcast %cst_17 : f32 to vector<1x256xf32>
      %75 = arith.mulf %73, %74 : vector<1x256xf32>
      %76 = math.floor %75 : vector<1x256xf32>
      %cst_18 = arith.constant 0.000000e+00 : f32
      %cst_19 = arith.constant 2.550000e+02 : f32
      %77 = vector.broadcast %cst_18 : f32 to vector<1x256xf32>
      %78 = arith.maximumf %77, %76 : vector<1x256xf32>
      %79 = vector.broadcast %cst_19 : f32 to vector<1x256xf32>
      %80 = arith.minimumf %79, %78 : vector<1x256xf32>
      %81 = arith.index_cast %arg4 : i32 to index
      %c1_20 = arith.constant 1 : index
      %c0_21 = arith.constant 0 : index
      %82 = vector.load %arg3[%81, %c1_20, %c0_21] : memref<4x3x256xf32, #tpu.memory_space<vmem>>, vector<1x1x256xf32>
      %83 = vector.shape_cast %82 : vector<1x1x256xf32> to vector<1x256xf32>
      %84 = vector.shape_cast %80 : vector<1x256xf32> to vector<1x1x256xf32>
      tpu.vector_store %arg3[%81, %c1_20, %c0_21], %84 {strides = array<i32>} : memref<4x3x256xf32, #tpu.memory_space<vmem>>, vector<1x1x256xf32>,
      %85 = vector.extract_strided_slice %54 {offsets = [64, 0], sizes = [32, 256], strides = [1, 1]} : vector<96x256xf32> to vector<32x256xf32>
      %86 = arith.mulf %85, %50 : vector<32x256xf32>
      %cst_22 = arith.constant dense<0.000000e+00> : vector<256xf32>
      %87 = vector.multi_reduction <add>, %86, %cst_22 [0] : vector<32x256xf32> to vector<256xf32>
      %88 = vector.shape_cast %87 : vector<256xf32> to vector<1x256xf32>
      %cst_23 = arith.constant 2.550000e+02 : f32
      %89 = vector.broadcast %cst_23 : f32 to vector<1x256xf32>
      %90 = arith.mulf %88, %89 : vector<1x256xf32>
      %91 = math.floor %90 : vector<1x256xf32>
      %cst_24 = arith.constant 0.000000e+00 : f32
      %cst_25 = arith.constant 2.550000e+02 : f32
      %92 = vector.broadcast %cst_24 : f32 to vector<1x256xf32>
      %93 = arith.maximumf %92, %91 : vector<1x256xf32>
      %94 = vector.broadcast %cst_25 : f32 to vector<1x256xf32>
      %95 = arith.minimumf %94, %93 : vector<1x256xf32>
      %96 = arith.index_cast %arg4 : i32 to index
      %c2_26 = arith.constant 2 : index
      %c0_27 = arith.constant 0 : index
      %97 = vector.load %arg3[%96, %c2_26, %c0_27] : memref<4x3x256xf32, #tpu.memory_space<vmem>>, vector<1x1x256xf32>
      %98 = vector.shape_cast %97 : vector<1x1x256xf32> to vector<1x256xf32>
      %99 = vector.shape_cast %95 : vector<1x256xf32> to vector<1x1x256xf32>
      tpu.vector_store %arg3[%96, %c2_26, %c0_27], %99 {strides = array<i32>} : memref<4x3x256xf32, #tpu.memory_space<vmem>>, vector<1x1x256xf32>,
    }
    %c4_i32_2 = arith.constant 4 : i32
    return
  }
  func.func @transform_0(%arg0: i32, %arg1: memref<8x4xf32, #tpu.memory_space<smem>>) -> (i32, i32, i32) {
    %c0_i32 = arith.constant 0 : i32
    %c0_i32_0 = arith.constant 0 : i32
    %c0_i32_1 = arith.constant 0 : i32
    return %arg0, %c0_i32, %c0_i32_0 : i32, i32, i32
  }
  func.func @transform_1(%arg0: i32, %arg1: memref<8x4xf32, #tpu.memory_space<smem>>) -> (i32, i32, i32) {
    %c0_i32 = arith.constant 0 : i32
    %c0_i32_0 = arith.constant 0 : i32
    %c0_i32_1 = arith.constant 0 : i32
    return %arg0, %c0_i32, %c0_i32_0 : i32, i32, i32
  }
}

</mosaic_0001>

<llo_original>
// kernel: tpu_custom_call.1
$region0: #{tpu_custom_call.1}
  #allocation0 [shape = 'u32[]', space=smem, size = 0x4, offset = 0x4, fixed_abs, tag = 'smem constant byte address 0x4 - core index']
  #allocation1 [shape = 'u32[144,128]{1,0:T(1,128)}', space=vmem, size = 0x12000, scoped, tag = 'internal scratch']
  #allocation2 [shape = 's32[1]{0}', space=sflag, size = 0x4, scoped, tag = 'scoped memory for tpu_custom_call.1']
  #allocation3 [shape = 'u8[4096]{0}', space=smem, size = 0x1000, scoped, tag = 'prefetched SMEM operand 0']
  %s0 = inlined_call_operand.vmem [shape: f32[8,4], index: 0, kind: input, shape index: {}]
  %s1 = inlined_call_operand.vmem [shape: f32[8,96,32], index: 1, kind: input, shape index: {}]
  %s2 = inlined_call_operand.vmem [shape: f32[8,3,256], index: 2, kind: output, shape index: {}]
  %s3 = sld [smem:[#allocation0]]
  $region44: #{tpu_custom_call.1} parent=0
    _
  %s5 = ssub.s32 1, %s3
  %s6 = scalar_select 0, %s5, %s3
  %s7 = sshll.u32 %s0, 4
  %s8 = int_to_ptr.vmem [resolvable:$true] %s7
  %10 = dma.vmem_to_smem %s8, 128, [#allocation3], [#allocation2]
  %11 = dma.done [#allocation2], 128
  %12 = sfence
  loop: start=0, step=1, limit=4
  $region2: #{tpu_custom_call.1} parent=0 // loop_pre_header
    _
  $region3: #{tpu_custom_call.1} parent=0 // loop_header
    %s14 = sphi 0, %s18
    %p15 = scmp.ge.s32.totalorder %s14, 4
    %s24 = sphi 0, %s26
    %s27 = sphi 0, %s24
    %s28 = sphi 0, %s27
    %s44 = sphi 0, %s28
    %s50 = sphi 0, %s52
    %s53 = sphi 0, %s50
    %s54 = sphi 0, %s53
    %s70 = sphi 0, %s54
  $region4: #{tpu_custom_call.1} parent=0 // loop_header_branch
    %17 = sbr.rel (%p15) target = $region8
  $region5: #{tpu_custom_call.1} parent=0 // loop_body
    %s19 = ssub.s32 %s14, 1
    %s20 = ssub.s32 %s14, 2
    %s21 = sadd.s32 %s14, 1
    %s22 = ssub.s32 %s14, %s21
    %p23 = scmp.eq.s32.totalorder %s22, 0
    %s25 = sadd.s32 %s24, 1
    %s26 = scalar_select %p23, %s24, %s25
    %p29 = pneg %p23
    %p30 = scmp.eq.s32.totalorder %s14, 1
    %p31 = por %p29, %p30
    %p32 = scmp.ne.s32.totalorder %s24, %s27
    %p33 = scmp.eq.s32.totalorder %s14, 0
    %p34 = por %p32, %p33
    %p35 = scmp.ne.s32.totalorder %s24, %s27
    %p36 = scmp.eq.s32.totalorder %s19, 1
    %p37 = por %p35, %p36
    %p38 = scmp.ne.s32.totalorder %s27, %s28
    %p39 = scmp.eq.s32.totalorder %s19, 0
    %p40 = por %p38, %p39
    %p41 = scmp.ne.s32.totalorder %s27, %s28
    %p42 = scmp.eq.s32.totalorder %s20, 1
    %p43 = por %p41, %p42
    %p45 = scmp.ne.s32.totalorder %s28, %s44
    %p46 = scmp.eq.s32.totalorder %s20, 0
    %p47 = por %p45, %p46
    %s48 = ssub.s32 %s14, %s21
    %p49 = scmp.eq.s32.totalorder %s48, 0
    %s51 = sadd.s32 %s50, 1
    %s52 = scalar_select %p49, %s50, %s51
    %p55 = pneg %p49
    %p56 = scmp.eq.s32.totalorder %s14, 1
    %p57 = por %p55, %p56
    %p58 = scmp.ne.s32.totalorder %s50, %s53
    %p59 = scmp.eq.s32.totalorder %s14, 0
    %p60 = por %p58, %p59
    %p61 = scmp.ne.s32.totalorder %s50, %s53
    %p62 = scmp.eq.s32.totalorder %s19, 1
    %p63 = por %p61, %p62
    %p64 = scmp.ne.s32.totalorder %s53, %s54
    %p65 = scmp.eq.s32.totalorder %s19, 0
    %p66 = por %p64, %p65
    %p67 = scmp.ne.s32.totalorder %s53, %s54
    %p68 = scmp.eq.s32.totalorder %s20, 1
    %p69 = por %p67, %p68
    %p71 = scmp.ne.s32.totalorder %s54, %s70
    %p72 = scmp.eq.s32.totalorder %s20, 0
    %p73 = por %p71, %p72
    %p74 = scmp.le.s32.totalorder 1, %s14
    %p75 = scmp.lt.s32.totalorder %s14, 3
    %p76 = pnand %p74, %p75
    %p77 = pneg %p76
    // Predicated region
    $region9: #{tpu_custom_call.1} parent=5 // pred_check
      _
    $region10: #{tpu_custom_call.1} parent=5 // pred_check_branch
      %79 = sbr.rel (%p76) target = $region12
    $region11: #{tpu_custom_call.1} parent=5 // pred_region
      %s80 = ssub.s32 %s14, 1
    $region12: #{tpu_custom_call.1} parent=5 // pred_fallthru
      _
    %p81 = scmp.lt.s32.totalorder %s14, 2
    // Predicated region
    $region13: #{tpu_custom_call.1} parent=5 // pred_check
      %p82 = pneg %p81
    $region14: #{tpu_custom_call.1} parent=5 // pred_check_branch
      %84 = sbr.rel (%p82) target = $region16
    $region15: #{tpu_custom_call.1} parent=5 // pred_region
      // Predicated region
      $region17: #{tpu_custom_call.1} parent=15 // pred_check
        %p85 = pneg %p34
      $region18: #{tpu_custom_call.1} parent=15 // pred_check_branch
        %87 = sbr.rel (%p85) target = $region20
      $region19: #{tpu_custom_call.1} parent=15 // pred_region
        %s88 = smul.u32 4, %s14
        %p89 = scmp.lt.s32.totalorder %s88, 7
        %s90 = scalar_select %p89, %s88, 7
        %s91 = smul.addr %s90, 12
        %s92 = smul.addr %s91, 8
        %s93 = scalar_lea.vmem %s1, %s92
        %s94 = smul.u32 4, %s14
      $region20: #{tpu_custom_call.1} parent=15 // pred_fallthru
        _
    $region16: #{tpu_custom_call.1} parent=5 // pred_fallthru
      _
    %p95 = scmp.le.s32.totalorder 1, %s14
    %p96 = scmp.lt.s32.totalorder %s14, 3
    %p97 = pnand %p95, %p96
    %p98 = pneg %p97
    // Predicated region
    $region21: #{tpu_custom_call.1} parent=5 // pred_check
      _
    $region22: #{tpu_custom_call.1} parent=5 // pred_check_branch
      %100 = sbr.rel (%p97) target = $region24
    $region23: #{tpu_custom_call.1} parent=5 // pred_region
      %s101 = ssub.s32 %s14, 1
      %s102 = smul.u32 4, %s19
      %p103 = scmp.lt.s32.totalorder %s102, 7
      %s104 = scalar_select %p103, %s102, 7
      %s105 = smul.addr %s104, 12
      %s106 = smul.addr %s105, 8
      %s107 = scalar_lea.vmem %s1, %s106
      %p108 = pneg %p40
      %p109 = pneg %p37
      %p110 = pneg %p66
      %p111 = pneg %p63
      %s112 = smul.u32 4, %s19
      %p113 = scmp.lt.s32.totalorder %s112, 7
      %s114 = scalar_select %p113, %s112, 7
      %s115 = smul.addr %s114, 2
      %s116 = smul.addr %s115, 4
      %s117 = scalar_lea.vmem %s2, %s116
      %s118 = smul.u32 4, %s19
      %p119 = scmp.lt.s32.totalorder %s118, 7
      %s120 = scalar_select %p119, %s118, 7
      %s121 = smul.addr %s120, 12
      %s122 = smul.addr %s121, 8
      %s123 = scalar_lea.vmem %s1, %s122
      %s124 = smul.u32 4, %s19
      %s125 = smul.u32 4, %s19
      %p126 = scmp.lt.s32.totalorder %s125, 7
      %s127 = scalar_select %p126, %s125, 7
      %s128 = smul.addr %s127, 2
      %s129 = smul.addr %s128, 4
      %s130 = scalar_lea.vmem %s2, %s129
      %s131 = smul.u32 4, %s19
      %v132 = vlaneseq
      %v133 = vand.u32 %v132, 127
      %v134 = vadd.s32 %v133, 128
      %v135 = vshra.s32 %v133, 4
      %v136 = vshra.s32 %v134, 4
      %v137 = vcvt.s32.f32 %v135
      %v138 = vcvt.s32.f32 %v136
      %v139 = vand.u32 %v133, 15
      %v140 = vand.u32 %v134, 15
      %v141 = vcvt.s32.f32 %v139
      %v142 = vcvt.s32.f32 %v140
      %v143 = vlaneseq
      %v144 = vshrl.u32 %v143, 7
      %v145 = vadd.s32 %v144, 8
      %v146 = vadd.s32 %v144, 16
      %v147 = vadd.s32 %v144, 24
      %v148 = vcvt.s32.f32 %v144
      %v149 = vcvt.s32.f32 %v145
      %v150 = vcvt.s32.f32 %v146
      %v151 = vcvt.s32.f32 %v147
      %s152 = smul.u32 %s19, 4
      loop: start=0, step=1, limit=4
      $region25: #{tpu_custom_call.1} parent=23 // loop_pre_header
        _
      $region26: #{tpu_custom_call.1} parent=23 // loop_header
        %s154 = sphi 0, %s158
        %p155 = scmp.ge.s32.totalorder %s154, 4
      $region27: #{tpu_custom_call.1} parent=23 // loop_header_branch
        %157 = sbr.rel (%p155) target = $region31
      $region28: #{tpu_custom_call.1} parent=23 // loop_body
        %s159 = sadd.s32 %s152, %s154
        %s160 = smul.u32 %s159, 128
        %s161 = sld [smem:[#allocation3 + %s160]]
        %s162 = sadd.s32 %s160, 1
        %s163 = sld [smem:[#allocation3 + %s162]]
        %s164 = sadd.s32 %s160, 2
        %s165 = sld [smem:[#allocation3 + %s164]]
        %s166 = sadd.s32 %s160, 3
        %s167 = sld [smem:[#allocation3 + %s166]]
        %v168 = vstv %s161
        %v169 = vmul.f32 %v168, %v141
        %v170 = vmul.f32 %v168, %v142
        %v171 = vstv %s163
        %v172 = vmul.f32 %v171, %v137
        %v173 = vmul.f32 %v171, %v138
        %v174 = vadd.f32 %v169, %v172
        %v175 = vadd.f32 %v170, %v173
        %v176 = vstv %s165
        %v177 = vadd.f32 %v174, %v176
        %v178 = vadd.f32 %v175, %v176
        %s179 = ssub.f32 0.0, %s163
        %v180 = vstv %s179
        %v181 = vmul.f32 %v180, %v141
        %v182 = vmul.f32 %v180, %v142
        %v183 = vmul.f32 %v168, %v137
        %v184 = vmul.f32 %v168, %v138
        %v185 = vadd.f32 %v181, %v183
        %v186 = vadd.f32 %v182, %v184
        %v187 = vstv %s167
        %v188 = vadd.f32 %v185, %v187
        %v189 = vadd.f32 %v186, %v187
        %v190 = vsub.f32 %v148, %v177
        %v191 = vsub.f32 %v148, %v178
        %v192 = vsub.f32 %v149, %v177
        %v193 = vsub.f32 %v149, %v178
        %v194 = vsub.f32 %v150, %v177
        %v195 = vsub.f32 %v150, %v178
        %v196 = vsub.f32 %v151, %v177
        %v197 = vsub.f32 %v151, %v178
        %v198 = vand.u32 2147483647, %v190
        %v199 = vand.u32 2147483647, %v191
        %v200 = vand.u32 2147483647, %v192
        %v201 = vand.u32 2147483647, %v193
        %v202 = vand.u32 2147483647, %v194
        %v203 = vand.u32 2147483647, %v195
        %v204 = vand.u32 2147483647, %v196
        %v205 = vand.u32 2147483647, %v197
        %v206 = vsub.f32 1.0, %v198
        %v207 = vsub.f32 1.0, %v199
        %v208 = vsub.f32 1.0, %v200
        %v209 = vsub.f32 1.0, %v201
        %v210 = vsub.f32 1.0, %v202
        %v211 = vsub.f32 1.0, %v203
        %v212 = vsub.f32 1.0, %v204
        %v213 = vsub.f32 1.0, %v205
        %v214 = vmax.f32 %v206, 0.0
        %v215 = vmax.f32 %v207, 0.0
        %v216 = vmax.f32 %v208, 0.0
        %v217 = vmax.f32 %v209, 0.0
        %v218 = vmax.f32 %v210, 0.0
        %v219 = vmax.f32 %v211, 0.0
        %v220 = vmax.f32 %v212, 0.0
        %v221 = vmax.f32 %v213, 0.0
        %v222 = vsub.f32 %v148, %v188
        %v223 = vsub.f32 %v148, %v189
        %v224 = vsub.f32 %v149, %v188
        %v225 = vsub.f32 %v149, %v189
        %v226 = vsub.f32 %v150, %v188
        %v227 = vsub.f32 %v150, %v189
        %v228 = vsub.f32 %v151, %v188
        %v229 = vsub.f32 %v151, %v189
        %v230 = vand.u32 2147483647, %v222
        %v231 = vand.u32 2147483647, %v223
        %v232 = vand.u32 2147483647, %v224
        %v233 = vand.u32 2147483647, %v225
        %v234 = vand.u32 2147483647, %v226
        %v235 = vand.u32 2147483647, %v227
        %v236 = vand.u32 2147483647, %v228
        %v237 = vand.u32 2147483647, %v229
        %v238 = vsub.f32 1.0, %v230
        %v239 = vsub.f32 1.0, %v231
        %v240 = vsub.f32 1.0, %v232
        %v241 = vsub.f32 1.0, %v233
        %v242 = vsub.f32 1.0, %v234
        %v243 = vsub.f32 1.0, %v235
        %v244 = vsub.f32 1.0, %v236
        %v245 = vsub.f32 1.0, %v237
        %v246 = vmax.f32 %v238, 0.0
        %v247 = vmax.f32 %v239, 0.0
        %v248 = vmax.f32 %v240, 0.0
        %v249 = vmax.f32 %v241, 0.0
        %v250 = vmax.f32 %v242, 0.0
        %v251 = vmax.f32 %v243, 0.0
        %v252 = vmax.f32 %v244, 0.0
        %v253 = vmax.f32 %v245, 0.0
        %s254 = smul.u32 %s154, 96
        %s255 = scalar_lea.vmem %s123, %s254
        %v256 = vld [vmem:[%s255] sm:$0xff]
        %v257 = vld [vmem:[%s255 + $0x8] sm:$0xff]
        %v258 = vld [vmem:[%s255 + $0x10] sm:$0xff]
        %v259 = vld [vmem:[%s255 + $0x18] sm:$0xff]
        %v260 = vld [vmem:[%s255 + $0x20] sm:$0xff]
        %v261 = vld [vmem:[%s255 + $0x28] sm:$0xff]
        %v262 = vld [vmem:[%s255 + $0x30] sm:$0xff]
        %v263 = vld [vmem:[%s255 + $0x38] sm:$0xff]
        %v264 = vld [vmem:[%s255 + $0x40] sm:$0xff]
        %v265 = vld [vmem:[%s255 + $0x48] sm:$0xff]
        %v266 = vld [vmem:[%s255 + $0x50] sm:$0xff]
        %v267 = vld [vmem:[%s255 + $0x58] sm:$0xff]
        %vm268 = vcmask 261120
        %v270 = vsel %vm268, %v256, 0
        %v273 = vsel %vm268, %v257, 0
        %v276 = vsel %vm268, %v258, 0
        %v279 = vsel %vm268, %v259, 0
        %v282 = vsel %vm268, %v260, 0
        %v285 = vsel %vm268, %v261, 0
        %v288 = vsel %vm268, %v262, 0
        %v291 = vsel %vm268, %v263, 0
        %v294 = vsel %vm268, %v264, 0
        %v297 = vsel %vm268, %v265, 0
        %v300 = vsel %vm268, %v266, 0
        %v303 = vsel %vm268, %v267, 0
        %305 = vmatprep.subr.mxu0 %v215
        %306 = vmatpush1.msra.mxu0 %v214
        %307 = vmatprep.subr.mxu0 %v217
        %308 = vmatpush1.msra.mxu0 %v216
        %309 = vmatprep.subr.mxu0 %v219
        %310 = vmatpush1.msra.mxu0 %v218
        %311 = vmatprep.subr.mxu0 %v221
        %312 = vmatpush1.msra.mxu0 %v220
        %313 = vmatprep.subr.mxu0 0.0
        %314 = vmatpush1.msra.mxu0 0.0
        %315 = vmatprep.subr.mxu0 0.0
        %316 = vmatpush1.msra.mxu0 0.0
        %317 = vmatprep.subr.mxu0 0.0
        %318 = vmatpush1.msra.mxu0 0.0
        %319 = vmatprep.subr.mxu0 0.0
        %320 = vmatpush1.msra.mxu0 0.0
        %321 = vmatprep.subr.mxu0 0.0
        %322 = vmatpush1.msra.mxu0 0.0
        %323 = vmatprep.subr.mxu0 0.0
        %324 = vmatpush1.msra.mxu0 0.0
        %325 = vmatprep.subr.mxu0 0.0
        %326 = vmatpush1.msra.mxu0 0.0
        %327 = vmatprep.subr.mxu0 0.0
        %328 = vmatpush1.msra.mxu0 0.0
        %329 = vmatprep.subr.mxu0 0.0
        %330 = vmatpush1.msra.mxu0 0.0
        %331 = vmatprep.subr.mxu0 0.0
        %332 = vmatpush1.msra.mxu0 0.0
        %333 = vmatprep.subr.mxu0 0.0
        %334 = vmatpush1.msra.mxu0 0.0
        %335 = vmatprep.subr.mxu0 0.0
        %336 = vmatpush1.msra.mxu0 0.0
        %337 = vmatprep.subr.mxu0 0.0
        %338 = vmatpush1.msra.mxu0 0.0
        %339 = vmatprep.subr.mxu0 0.0
        %340 = vmatpush1.msra.mxu0 0.0
        %341 = vmatprep.subr.mxu0 0.0
        %342 = vmatpush1.msra.mxu0 0.0
        %343 = vmatprep.subr.mxu0 0.0
        %344 = vmatpush1.msra.mxu0 0.0
        %345 = vmatprep.subr.mxu0 0.0
        %346 = vmatpush1.msra.mxu0 0.0
        %347 = vmatprep.subr.mxu0 0.0
        %348 = vmatpush1.msra.mxu0 0.0
        %349 = vmatprep.subr.mxu0 0.0
        %350 = vmatpush1.msra.mxu0 0.0
        %351 = vmatprep.subr.mxu0 0.0
        %352 = vmatpush1.msra.mxu0 0.0
        %353 = vmatprep.subr.mxu0 0.0
        %354 = vmatpush1.msra.mxu0 0.0
        %355 = vmatprep.subr.mxu0 0.0
        %356 = vmatpush1.msra.mxu0 0.0
        %357 = vmatprep.subr.mxu0 0.0
        %358 = vmatpush1.msra.mxu0 0.0
        %359 = vmatprep.subr.mxu0 0.0
        %360 = vmatpush1.msra.mxu0 0.0
        %361 = vmatprep.subr.mxu0 0.0
        %362 = vmatpush1.msra.mxu0 0.0
        %363 = vmatprep.subr.mxu0 0.0
        %364 = vmatpush1.msra.mxu0 0.0
        %365 = vmatprep.subr.mxu0 0.0
        %366 = vmatpush1.msra.mxu0 0.0
        %367 = vmatprep.subr.mxu0 0.0
        %368 = vmatpush1.msra.mxu0 0.0
        %369 = vmatprep.mubr.f32.mxu0 0.0
        %370 = vmatmul.mubr.f32.gmra.mrb[0].mxu0 %v270
        %v371 = vpop.f32.mrb[0].mxu0
        %v372 = vadd.f32 0.0, %v371
        %v373 = vpop.f32.mrb[0].mxu0
        %v374 = vadd.f32 0.0, %v373
        %375 = vmatprep.mubr.f32.mxu0 0.0
        %376 = vmatmul.mubr.f32.gmra.mrb[0].mxu0 %v273
        %v377 = vpop.f32.mrb[0].mxu0
        %v378 = vadd.f32 0.0, %v377
        %v379 = vpop.f32.mrb[0].mxu0
        %v380 = vadd.f32 0.0, %v379
        %381 = vmatprep.mubr.f32.mxu0 0.0
        %382 = vmatmul.mubr.f32.gmra.mrb[0].mxu0 %v276
        %v383 = vpop.f32.mrb[0].mxu0
        %v384 = vadd.f32 0.0, %v383
        %v385 = vpop.f32.mrb[0].mxu0
        %v386 = vadd.f32 0.0, %v385
        %387 = vmatprep.mubr.f32.mxu0 0.0
        %388 = vmatmul.mubr.f32.gmra.mrb[0].mxu0 %v279
        %v389 = vpop.f32.mrb[0].mxu0
        %v390 = vadd.f32 0.0, %v389
        %v391 = vpop.f32.mrb[0].mxu0
        %v392 = vadd.f32 0.0, %v391
        %393 = vmatprep.mubr.f32.mxu0 0.0
        %394 = vmatmul.mubr.f32.gmra.mrb[0].mxu0 %v282
        %v395 = vpop.f32.mrb[0].mxu0
        %v396 = vadd.f32 0.0, %v395
        %v397 = vpop.f32.mrb[0].mxu0
        %v398 = vadd.f32 0.0, %v397
        %399 = vmatprep.mubr.f32.mxu0 0.0
        %400 = vmatmul.mubr.f32.gmra.mrb[0].mxu0 %v285
        %v401 = vpop.f32.mrb[0].mxu0
        %v402 = vadd.f32 0.0, %v401
        %v403 = vpop.f32.mrb[0].mxu0
        %v404 = vadd.f32 0.0, %v403
        %405 = vmatprep.mubr.f32.mxu0 0.0
        %406 = vmatmul.mubr.f32.gmra.mrb[0].mxu0 %v288
        %v407 = vpop.f32.mrb[0].mxu0
        %v408 = vadd.f32 0.0, %v407
        %v409 = vpop.f32.mrb[0].mxu0
        %v410 = vadd.f32 0.0, %v409
        %411 = vmatprep.mubr.f32.mxu0 0.0
        %412 = vmatmul.mubr.f32.gmra.mrb[0].mxu0 %v291
        %v413 = vpop.f32.mrb[0].mxu0
        %v414 = vadd.f32 0.0, %v413
        %v415 = vpop.f32.mrb[0].mxu0
        %v416 = vadd.f32 0.0, %v415
        %417 = vmatprep.mubr.f32.mxu0 0.0
        %418 = vmatmul.mubr.f32.gmra.mrb[0].mxu0 %v294
        %v419 = vpop.f32.mrb[0].mxu0
        %v420 = vadd.f32 0.0, %v419
        %v421 = vpop.f32.mrb[0].mxu0
        %v422 = vadd.f32 0.0, %v421
        %423 = vmatprep.mubr.f32.mxu0 0.0
        %424 = vmatmul.mubr.f32.gmra.mrb[0].mxu0 %v297
        %v425 = vpop.f32.mrb[0].mxu0
        %v426 = vadd.f32 0.0, %v425
        %v427 = vpop.f32.mrb[0].mxu0
        %v428 = vadd.f32 0.0, %v427
        %429 = vmatprep.mubr.f32.mxu0 0.0
        %430 = vmatmul.mubr.f32.gmra.mrb[0].mxu0 %v300
        %v431 = vpop.f32.mrb[0].mxu0
        %v432 = vadd.f32 0.0, %v431
        %v433 = vpop.f32.mrb[0].mxu0
        %v434 = vadd.f32 0.0, %v433
        %435 = vmatprep.mubr.f32.mxu0 0.0
        %436 = vmatmul.mubr.f32.gmra.mrb[0].mxu0 %v303
        %v437 = vpop.f32.mrb[0].mxu0
        %v438 = vadd.f32 0.0, %v437
        %v439 = vpop.f32.mrb[0].mxu0
        %v440 = vadd.f32 0.0, %v439
        %441 = vdwg.mxu0
        %v442 = vmul.f32 %v372, %v246
        %v443 = vmul.f32 %v374, %v247
        %v444 = vmul.f32 %v378, %v248
        %v445 = vmul.f32 %v380, %v249
        %v446 = vmul.f32 %v384, %v250
        %v447 = vmul.f32 %v386, %v251
        %v448 = vmul.f32 %v390, %v252
        %v449 = vmul.f32 %v392, %v253
        %v450 = vadd.f32 %v442, %v444
        %v451 = vadd.f32 %v450, %v446
        %v452 = vadd.f32 %v451, %v448
        %v453 = vrot.slane %v452, 4
        %v454 = vadd.f32 %v452, %v453
        %v455 = vrot.slane %v454, 2
        %v456 = vadd.f32 %v454, %v455
        %v457 = vrot.slane %v456, 1
        %v458 = vadd.f32 %v456, %v457
        %v459 = vadd.f32 %v443, %v445
        %v460 = vadd.f32 %v459, %v447
        %v461 = vadd.f32 %v460, %v449
        %v462 = vrot.slane %v461, 4
        %v463 = vadd.f32 %v461, %v462
        %v464 = vrot.slane %v463, 2
        %v465 = vadd.f32 %v463, %v464
        %v466 = vrot.slane %v465, 1
        %v467 = vadd.f32 %v465, %v466
        %v468 = vmul.f32 %v458, 255.0
        %v469 = vmul.f32 %v467, 255.0
        %v470 = vfloor.f32 %v468
        %v471 = vfloor.f32 %v469
        %v472 = vmax.f32 %v470, 0.0
        %v473 = vmax.f32 %v471, 0.0
        %v474 = vmin.f32 %v472, 255.0
        %v475 = vmin.f32 %v473, 255.0
        %v478 = vcombine.low %v474, %v475
        %v480 = vunpack.c.l.s4 1966171168
        %v481 = vunpack.c.0.s8 %v480
        %v482 = vlaneseq
        %v483 = vshrl.u32 %v482, 7
        %v484 = vsub.s32 %v481, %v483
        %v485 = vrot.slane %v478, %v484
        %v487 = vunpack.c.l.s4 1966171168
        %v488 = vunpack.c.0.s8 %v487
        %v489 = vlaneseq
        %v490 = vshrl.u32 %v489, 7
        %v491 = vsub.s32 %v488, %v490
        %v492 = vrot.slane %v485, %v491
        %s494 = smul.u32 %s154, 2
        %s495 = smul.addr %s494, 4
        %s496 = scalar_lea.vmem %s130, %s495
        %v497 = vlaneseq
        %vm498 = vcmp.ge.s32.totalorder %v497, 0
        %vm499 = vcmp.lt.s32.totalorder %v497, 256
        %vm500 = vmand %vm498, %vm499
        %501 = vst.msk [vmem:[%s496] ss:$4 sm:$0x3] %vm500, %v492
        %v502 = vmul.f32 %v396, %v246
        %v503 = vmul.f32 %v398, %v247
        %v504 = vmul.f32 %v402, %v248
        %v505 = vmul.f32 %v404, %v249
        %v506 = vmul.f32 %v408, %v250
        %v507 = vmul.f32 %v410, %v251
        %v508 = vmul.f32 %v414, %v252
        %v509 = vmul.f32 %v416, %v253
        %v510 = vadd.f32 %v502, %v504
        %v511 = vadd.f32 %v510, %v506
        %v512 = vadd.f32 %v511, %v508
        %v513 = vrot.slane %v512, 4
        %v514 = vadd.f32 %v512, %v513
        %v515 = vrot.slane %v514, 2
        %v516 = vadd.f32 %v514, %v515
        %v517 = vrot.slane %v516, 1
        %v518 = vadd.f32 %v516, %v517
        %v519 = vadd.f32 %v503, %v505
        %v520 = vadd.f32 %v519, %v507
        %v521 = vadd.f32 %v520, %v509
        %v522 = vrot.slane %v521, 4
        %v523 = vadd.f32 %v521, %v522
        %v524 = vrot.slane %v523, 2
        %v525 = vadd.f32 %v523, %v524
        %v526 = vrot.slane %v525, 1
        %v527 = vadd.f32 %v525, %v526
        %v528 = vmul.f32 %v518, 255.0
        %v529 = vmul.f32 %v527, 255.0
        %v530 = vfloor.f32 %v528
        %v531 = vfloor.f32 %v529
        %v532 = vmax.f32 %v530, 0.0
        %v533 = vmax.f32 %v531, 0.0
        %v534 = vmin.f32 %v532, 255.0
        %v535 = vmin.f32 %v533, 255.0
        %v538 = vcombine.low %v534, %v535
        %v540 = vunpack.c.l.s4 1966171168
        %v541 = vunpack.c.0.s8 %v540
        %v542 = vlaneseq
        %v543 = vshrl.u32 %v542, 7
        %v544 = vsub.s32 %v541, %v543
        %v545 = vrot.slane %v538, %v544
        %v547 = vunpack.c.l.s4 1966171168
        %v548 = vunpack.c.0.s8 %v547
        %v549 = vlaneseq
        %v550 = vshrl.u32 %v549, 7
        %v551 = vsub.s32 %v548, %v550
        %v552 = vrot.slane %v545, %v551
        %s554 = scalar_lea.vmem %s496, 1
        %555 = vst.msk [vmem:[%s554] ss:$4 sm:$0x3] %vm500, %v552
        %v556 = vmul.f32 %v420, %v246
        %v557 = vmul.f32 %v422, %v247
        %v558 = vmul.f32 %v426, %v248
        %v559 = vmul.f32 %v428, %v249
        %v560 = vmul.f32 %v432, %v250
        %v561 = vmul.f32 %v434, %v251
        %v562 = vmul.f32 %v438, %v252
        %v563 = vmul.f32 %v440, %v253
        %v564 = vadd.f32 %v556, %v558
        %v565 = vadd.f32 %v564, %v560
        %v566 = vadd.f32 %v565, %v562
        %v567 = vrot.slane %v566, 4
        %v568 = vadd.f32 %v566, %v567
        %v569 = vrot.slane %v568, 2
        %v570 = vadd.f32 %v568, %v569
        %v571 = vrot.slane %v570, 1
        %v572 = vadd.f32 %v570, %v571
        %v573 = vadd.f32 %v557, %v559
        %v574 = vadd.f32 %v573, %v561
        %v575 = vadd.f32 %v574, %v563
        %v576 = vrot.slane %v575, 4
        %v577 = vadd.f32 %v575, %v576
        %v578 = vrot.slane %v577, 2
        %v579 = vadd.f32 %v577, %v578
        %v580 = vrot.slane %v579, 1
        %v581 = vadd.f32 %v579, %v580
        %v582 = vmul.f32 %v572, 255.0
        %v583 = vmul.f32 %v581, 255.0
        %v584 = vfloor.f32 %v582
        %v585 = vfloor.f32 %v583
        %v586 = vmax.f32 %v584, 0.0
        %v587 = vmax.f32 %v585, 0.0
        %v588 = vmin.f32 %v586, 255.0
        %v589 = vmin.f32 %v587, 255.0
        %v592 = vcombine.low %v588, %v589
        %v594 = vunpack.c.l.s4 1966171168
        %v595 = vunpack.c.0.s8 %v594
        %v596 = vlaneseq
        %v597 = vshrl.u32 %v596, 7
        %v598 = vsub.s32 %v595, %v597
        %v599 = vrot.slane %v592, %v598
        %v601 = vunpack.c.l.s4 1966171168
        %v602 = vunpack.c.0.s8 %v601
        %v603 = vlaneseq
        %v604 = vshrl.u32 %v603, 7
        %v605 = vsub.s32 %v602, %v604
        %v606 = vrot.slane %v599, %v605
        %s608 = scalar_lea.vmem %s496, 2
        %609 = vst.msk [vmem:[%s608] ss:$4 sm:$0x3] %vm500, %v606
      $region29: #{tpu_custom_call.1} parent=23 // loop_footer
        %s158 = sadd.s32 1, %s154
      $region30: #{tpu_custom_call.1} parent=23 // loop_footer_branch
        %153 = sbr.rel target = $region26
      $region31: #{tpu_custom_call.1} parent=23 // loop_exit
        _
      %s610 = smul.u32 4, %s19
      %p611 = scmp.lt.s32.totalorder %s610, 7
      %s612 = scalar_select %p611, %s610, 7
      %s613 = smul.addr %s612, 2
      %s614 = smul.addr %s613, 4
      %s615 = scalar_lea.vmem %s2, %s614
      // Predicated region
      $region32: #{tpu_custom_call.1} parent=23 // pred_check
        %p616 = pneg %p63
      $region33: #{tpu_custom_call.1} parent=23 // pred_check_branch
        %618 = sbr.rel (%p616) target = $region35
      $region34: #{tpu_custom_call.1} parent=23 // pred_region
        %s619 = smul.u32 4, %s19
      $region35: #{tpu_custom_call.1} parent=23 // pred_fallthru
        _
    $region24: #{tpu_custom_call.1} parent=5 // pred_fallthru
      _
    %p620 = scmp.le.s32.totalorder 2, %s14
    // Predicated region
    $region36: #{tpu_custom_call.1} parent=5 // pred_check
      %p621 = pneg %p620
    $region37: #{tpu_custom_call.1} parent=5 // pred_check_branch
      %623 = sbr.rel (%p621) target = $region39
    $region38: #{tpu_custom_call.1} parent=5 // pred_region
      %s624 = ssub.s32 %s14, 2
      // Predicated region
      $region40: #{tpu_custom_call.1} parent=38 // pred_check
        %p625 = pneg %p69
      $region41: #{tpu_custom_call.1} parent=38 // pred_check_branch
        %627 = sbr.rel (%p625) target = $region43
      $region42: #{tpu_custom_call.1} parent=38 // pred_region
        %s628 = smul.u32 4, %s20
        %p629 = scmp.lt.s32.totalorder %s628, 7
        %s630 = scalar_select %p629, %s628, 7
        %s631 = smul.addr %s630, 2
        %s632 = smul.addr %s631, 4
        %s633 = scalar_lea.vmem %s2, %s632
      $region43: #{tpu_custom_call.1} parent=38 // pred_fallthru
        _
    $region39: #{tpu_custom_call.1} parent=5 // pred_fallthru
      _
  $region6: #{tpu_custom_call.1} parent=0 // loop_footer
    %s18 = sadd.s32 1, %s14
  $region7: #{tpu_custom_call.1} parent=0 // loop_footer_branch
    %13 = sbr.rel target = $region3
  $region8: #{tpu_custom_call.1} parent=0 // loop_exit
    _

</llo_original>
